<compile_context>
chip_gen: v5e
topology: v5e:2x2
jax: 0.10.0
libtpu: 0.0.40
codegen_flags: <defaults>
</compile_context>

<pallas_src>
import jax
import jax.numpy as jnp
from jax.experimental import pallas as pl
from jax.experimental.pallas import tpu as pltpu

_MIB = 1024 * 1024


def _round_up(n, m):
    return ((n + m - 1) // m) * m


def _chip_defaults():
    """(tm_default, th_default, vmem_limit_bytes), generation-aware."""
    try:
        cap = pltpu.get_tpu_info().vmem_capacity_bytes
    except Exception:
        cap = 64 * _MIB                               # conservative (v7x-sized)
    if cap >= 96 * _MIB:                              # v5e / v6e: 128 MiB VMEM
        return 512, 1024, int(min(cap - 8 * _MIB, 100 * _MIB))
    # v7x: 64 MiB VMEM but ~2.3x HBM BW -> smaller tiles are already
    # compute-bound; keep well under the 64 MiB physical limit.
    return 384, 512, int(max(cap - 8 * _MIB, 32 * _MIB))


# ----------------------------------------------------------------------------
# Kernels
# ----------------------------------------------------------------------------
def _mlp_kernel_resident(x_ref, w1_ref, b1_ref, w2_ref, b2_ref, o_ref):
    """Whole hidden dim in one step; W1/W2 stay resident (constant index maps)."""
    h = jnp.dot(x_ref[...], w1_ref[...], preferred_element_type=jnp.float32)
    h = jnp.maximum(h + b1_ref[...], 0.0)                      # bias + ReLU, f32
    o = jnp.dot(h.astype(w2_ref.dtype), w2_ref[...],
                preferred_element_type=jnp.float32)
    o_ref[...] = (o + b2_ref[...]).astype(o_ref.dtype)


def _mlp_kernel_streamed(x_ref, w1_ref, b1_ref, w2_ref, b2_ref, o_ref, acc_ref):
    """Hidden dim streamed along grid axis 1; f32 accumulator in VMEM (P3)."""
    h_idx = pl.program_id(1)

    @pl.when(h_idx == 0)
    def _init():
        # Fold b2 into the init so the finalize step is a pure cast + store.
        acc_ref[...] = jnp.broadcast_to(b2_ref[...], acc_ref.shape)

    h = jnp.dot(x_ref[...], w1_ref[...], preferred_element_type=jnp.float32)
    h = jnp.maximum(h + b1_ref[...], 0.0)
    acc_ref[...] += jnp.dot(h.astype(w2_ref.dtype), w2_ref[...],
                            preferred_element_type=jnp.float32)

    @pl.when(h_idx == pl.num_programs(1) - 1)
    def _finalize():
        o_ref[...] = acc_ref[...].astype(o_ref.dtype)


# ----------------------------------------------------------------------------
# Tile planning
# ----------------------------------------------------------------------------
def _plan_tiles(M, E, H_pad, N_pad, in_itm, out_itm, budget, tm_req, th_req,
                force_streamed=False):
    """Pick (tm_eff, th_eff, resident) fitting the VMEM budget."""
    # Row tile: requested size, or (for small M) rounded up to a multiple of 16
    # (bf16 packs 16 rows per sublane group).
    tm_eff = tm_req if M >= tm_req else max(16, _round_up(M, 16))

    def resident_bytes(tm):
        return (2 * tm * E * in_itm            # x blocks (double-buffered)
                + 2 * E * H_pad * in_itm       # W1
                + 2 * H_pad * 4                # b1 (f32)
                + 2 * H_pad * N_pad * in_itm   # W2
                + 2 * N_pad * 4                # b2 (f32)
                + 2 * tm * N_pad * out_itm     # out blocks
                + tm * H_pad * 4)              # f32 hidden intermediate

    def streamed_bytes(tm, th):
        return (2 * tm * E * in_itm
                + 2 * E * th * in_itm
                + 2 * th * 4
                + 2 * th * N_pad * in_itm
                + 2 * N_pad * 4
                + 2 * tm * N_pad * out_itm
                + tm * N_pad * 4               # f32 accumulator scratch
                + tm * th * 4)                 # f32 hidden intermediate

    if not force_streamed and resident_bytes(tm_eff) <= budget:
        return tm_eff, H_pad, True

    def largest_dividing_tile(upper):
        th = max(128, (min(upper, H_pad) // 128) * 128)
        while H_pad % th != 0:                 # H_pad % 128 == 0 -> terminates
            th -= 128
        return th

    th_eff = largest_dividing_tile(th_req)
    # Shrink the hidden tile first, then the row tile, until the plan fits.
    while streamed_bytes(tm_eff, th_eff) > budget and th_eff > 128:
        nxt = largest_dividing_tile(th_eff // 2)
        if nxt == th_eff:
            break
        th_eff = nxt
    while streamed_bytes(tm_eff, th_eff) > budget and tm_eff > 16:
        tm_eff = max(16, _round_up(tm_eff // 2, 16))
    return tm_eff, th_eff, False


# ----------------------------------------------------------------------------
# Parameter prep (hoisted) + forward
# ----------------------------------------------------------------------------
def prepare_mlp_params(w1, b1, w2, b2, *, compute_dtype=jnp.bfloat16):
    """One-time weight prep (cast + lane padding), hoisted off the fwd path.

    w1: (E, H) = hidden.weight.T, b1: (H,), w2: (H, E) = proj.weight.T, b2: (E,).
    """
    E, H = w1.shape
    assert w2.shape == (H, E) and b1.shape == (H,) and b2.shape == (E,)
    H_pad = _round_up(H, 128)
    N_pad = _round_up(E, 128)
    w1c = jnp.pad(w1, ((0, 0), (0, H_pad - H))).astype(compute_dtype)
    b1r = jnp.pad(b1, (0, H_pad - H)).astype(jnp.float32).reshape(1, H_pad)
    w2c = jnp.pad(w2, ((0, H_pad - H), (0, N_pad - E))).astype(compute_dtype)
    b2r = jnp.pad(b2, (0, N_pad - E)).astype(jnp.float32).reshape(1, N_pad)
    return {"w1": w1c, "b1": b1r, "w2": w2c, "b2": b2r,
            "n_embed": E, "hidden": H,
            "compute_dtype": jnp.dtype(compute_dtype)}


def mlp_forward_prepared(x, params, *, tm=None, th=None,
                         vmem_limit_bytes=None, force_streamed=False):
    """x: (B, T, E); params from prepare_mlp_params()."""
    B, T, E_in = x.shape
    E = params["n_embed"]
    assert E_in == E
    w1c, b1r, w2c, b2r = params["w1"], params["b1"], params["w2"], params["b2"]
    compute_dtype = params["compute_dtype"]
    H_pad, N_pad = w1c.shape[1], w2c.shape[1]
    M = B * T

    tm_def, th_def, vmem_def = _chip_defaults()
    tm = tm_def if tm is None else tm
    th = th_def if th is None else th
    vmem_limit_bytes = vmem_def if vmem_limit_bytes is None else vmem_limit_bytes

    in_itm = jnp.dtype(compute_dtype).itemsize
    out_itm = jnp.dtype(x.dtype).itemsize
    budget = int(vmem_limit_bytes * 0.9)       # headroom for compiler scratch

    tm_eff, th_eff, resident = _plan_tiles(
        M, E, H_pad, N_pad, in_itm, out_itm, budget, tm, th,
        force_streamed=force_streamed)

    M_pad = _round_up(M, tm_eff)
    grid_m = M_pad // tm_eff

    # Per-call activation prep only; weight prep is hoisted.
    x2d = x.reshape(M, E)
    if M_pad != M:
        x2d = jnp.pad(x2d, ((0, M_pad - M), (0, 0)))
    xc = x2d.astype(compute_dtype)

    flops = 2 * M_pad * E * H_pad + 2 * M_pad * H_pad * N_pad
    weight_bytes = (w1c.size + w2c.size) * in_itm + (b1r.size + b2r.size) * 4
    io_bytes = xc.size * in_itm + M_pad * N_pad * out_itm
    out_shape = jax.ShapeDtypeStruct((M_pad, N_pad), x.dtype)

    if resident:
        grid_spec = pltpu.PrefetchScalarGridSpec(
            num_scalar_prefetch=0,
            grid=(grid_m,),
            in_specs=[
                pl.BlockSpec((tm_eff, E), lambda i: (i, 0)),          # x rows
                pl.BlockSpec((E, H_pad), lambda i: (0, 0)),           # W1 resident
                pl.BlockSpec((1, H_pad), lambda i: (0, 0)),           # b1
                pl.BlockSpec((H_pad, N_pad), lambda i: (0, 0)),       # W2 resident
                pl.BlockSpec((1, N_pad), lambda i: (0, 0)),           # b2
            ],
            out_specs=pl.BlockSpec((tm_eff, N_pad), lambda i: (i, 0)),
        )
        fn = pl.pallas_call(
            _mlp_kernel_resident,
            out_shape=out_shape,
            grid_spec=grid_spec,
            compiler_params=pltpu.CompilerParams(
                dimension_semantics=("parallel",),
                vmem_limit_bytes=int(vmem_limit_bytes)),
            cost_estimate=pl.CostEstimate(
                flops=int(flops), transcendentals=0,
                bytes_accessed=int(io_bytes + weight_bytes)),
        )
    else:
        grid_h = H_pad // th_eff
        grid_spec = pltpu.PrefetchScalarGridSpec(
            num_scalar_prefetch=0,
            grid=(grid_m, grid_h),
            in_specs=[
                pl.BlockSpec((tm_eff, E), lambda i, h: (i, 0)),       # x rows
                pl.BlockSpec((E, th_eff), lambda i, h: (0, h)),       # W1[:, h]
                pl.BlockSpec((1, th_eff), lambda i, h: (0, h)),       # b1[h]
                pl.BlockSpec((th_eff, N_pad), lambda i, h: (h, 0)),   # W2[h, :]
                pl.BlockSpec((1, N_pad), lambda i, h: (0, 0)),        # b2
            ],
            out_specs=pl.BlockSpec((tm_eff, N_pad), lambda i, h: (i, 0)),
            scratch_shapes=[pltpu.VMEM((tm_eff, N_pad), jnp.float32)],
        )
        fn = pl.pallas_call(
            _mlp_kernel_streamed,
            out_shape=out_shape,
            grid_spec=grid_spec,
            compiler_params=pltpu.CompilerParams(
                dimension_semantics=("parallel", "arbitrary"),
                vmem_limit_bytes=int(vmem_limit_bytes)),
            cost_estimate=pl.CostEstimate(
                flops=int(flops), transcendentals=0,
                bytes_accessed=int(io_bytes + grid_m * weight_bytes)),
        )

    out2d = fn(xc, w1c, b1r, w2c, b2r)
    return out2d[:M, :E].reshape(B, T, E)


def mlp_forward(x, w1, b1, w2, b2, *, compute_dtype=jnp.bfloat16, **kwargs):
    """Convenience wrapper; for repeated calls hoist prepare_mlp_params()."""
    params = prepare_mlp_params(w1, b1, w2, b2, compute_dtype=compute_dtype)
    return mlp_forward_prepared(x, params, **kwargs)


def mlp_reference(x, w1, b1, w2, b2, compute_dtype=jnp.float32):
    """Pure-JAX reference mirroring the kernel's dtype recipe."""
    B, T, E = x.shape
    hp = jax.lax.Precision.HIGHEST
    xc = x.reshape(B * T, E).astype(compute_dtype)
    h = jnp.dot(xc, w1.astype(compute_dtype),
                preferred_element_type=jnp.float32, precision=hp)
    h = jnp.maximum(h + b1.astype(jnp.float32), 0.0)
    o = jnp.dot(h.astype(compute_dtype), w2.astype(compute_dtype),
                preferred_element_type=jnp.float32, precision=hp)
    o = o + b2.astype(jnp.float32)
    return o.astype(x.dtype).reshape(B, T, E)


if __name__ == "__main__":
    def make_weights(key, E):
        # PyTorch Linear init style; weights stored as [in, out] (torch.T).
        H = 4 * E
        k1, k2, k3, k4 = jax.random.split(key, 4)
        bound1 = 1.0 / (E ** 0.5)
        bound2 = 1.0 / (H ** 0.5)
        w1 = jax.random.uniform(k1, (E, H), jnp.float32, -bound1, bound1)
        b1 = jax.random.uniform(k2, (H,),   jnp.float32, -bound1, bound1)
        w2 = jax.random.uniform(k3, (H, E), jnp.float32, -bound2, bound2)
        b2 = jax.random.uniform(k4, (E,),   jnp.float32, -bound2, bound2)
        return w1, b1, w2, b2

    key = jax.random.PRNGKey(0)
    kx1, kp1, kx2, kp2 = jax.random.split(key, 4)

    # --- Config 1: batch=2, seq=8, n_embed=32 (weights-resident fast path) ---
    B, T, E = 2, 8, 32
    x = jax.random.normal(kx1, (B, T, E), dtype=jnp.float32)
    w1, b1, w2, b2 = make_weights(kp1, E)

    # f32 compute path vs HIGHEST-precision f32 reference.
    p_f32 = prepare_mlp_params(w1, b1, w2, b2, compute_dtype=jnp.float32)
    out = jax.block_until_ready(mlp_forward_prepared(x, p_f32))
    ref = mlp_reference(x, w1, b1, w2, b2, compute_dtype=jnp.float32)
    assert out.shape == (B, T, E)
    assert jnp.allclose(out, ref, atol=1e-4, rtol=1e-4), "f32 resident mismatch"

    # bf16 compute path (default / perf config) vs bf16-recipe reference.
    p_bf16 = prepare_mlp_params(w1, b1, w2, b2, compute_dtype=jnp.bfloat16)
    out = jax.block_until_ready(mlp_forward_prepared(x, p_bf16))
    ref = mlp_reference(x, w1, b1, w2, b2, compute_dtype=jnp.bfloat16)
    assert jnp.allclose(out, ref, atol=1e-3, rtol=1e-3), "bf16 resident mismatch"

    # --- Config 2: n_embed=64; force the streamed/accumulator path with
    #     grid_m=2, grid_h=2 to exercise the multi-tile code path. ---
    B2, T2, E2 = 2, 8, 64
    x2 = jax.random.normal(kx2, (B2, T2, E2), dtype=jnp.float32)
    w1b, b1b, w2b, b2b = make_weights(kp2, E2)
    p2 = prepare_mlp_params(w1b, b1b, w2b, b2b, compute_dtype=jnp.bfloat16)
    out2 = jax.block_until_ready(
        mlp_forward_prepared(x2, p2, tm=8, th=128, force_streamed=True))
    ref2 = mlp_reference(x2, w1b, b1b, w2b, b2b, compute_dtype=jnp.bfloat16)
    assert out2.shape == (B2, T2, E2)
    assert jnp.allclose(out2, ref2, atol=1e-3, rtol=1e-3), "bf16 streamed mismatch"

    print("KERNEL_OK")
</pallas_src>

<mosaic_0001>
module attributes {stable_mosaic.version = 11 : i64} {
  func.func @_mlp_kernel_resident(%arg0: i32, %arg1: memref<16x32xf32, #tpu.memory_space<vmem>>, %arg2: memref<32x128xf32, #tpu.memory_space<vmem>>, %arg3: memref<1x128xf32, #tpu.memory_space<vmem>>, %arg4: memref<128x128xf32, #tpu.memory_space<vmem>>, %arg5: memref<1x128xf32, #tpu.memory_space<vmem>>, %arg6: memref<16x128xf32, #tpu.memory_space<vmem>>) attributes {dimension_semantics = [#tpu.dimension_semantics<parallel>], iteration_bounds = array<i64: 1>, scalar_prefetch = 0 : i64, scratch_operands = 0 : i64, tpu.core_type = #tpu.core_type<tc>, window_params = [{transform_indices = @transform_0, window_bounds = array<i64: 16, 32>}, {pipeline_mode = #tpu.pipeline_mode<synchronous>, transform_indices = @transform_1, window_bounds = array<i64: 32, 128>}, {pipeline_mode = #tpu.pipeline_mode<synchronous>, transform_indices = @transform_2, window_bounds = array<i64: 1, 128>}, {pipeline_mode = #tpu.pipeline_mode<synchronous>, transform_indices = @transform_3, window_bounds = array<i64: 128, 128>}, {pipeline_mode = #tpu.pipeline_mode<synchronous>, transform_indices = @transform_4, window_bounds = array<i64: 1, 128>}, {transform_indices = @transform_5, window_bounds = array<i64: 16, 128>}]} {
    %c0 = arith.constant 0 : index
    %c0_0 = arith.constant 0 : index
    %0 = vector.load %arg1[%c0, %c0_0] : memref<16x32xf32, #tpu.memory_space<vmem>>, vector<16x32xf32>
    %c0_1 = arith.constant 0 : index
    %c0_2 = arith.constant 0 : index
    %1 = vector.load %arg2[%c0_1, %c0_2] : memref<32x128xf32, #tpu.memory_space<vmem>>, vector<32x128xf32>
    %cst = arith.constant dense<0.000000e+00> : vector<16x128xf32>
    %2 = tpu.matmul %0, %1, %cst {dimension_numbers = #tpu.dot_dimension_numbers<[1], [0], [0], [1], [0, 0, 1, 1], [], []>} : vector<16x32xf32>, vector<32x128xf32>, vector<16x128xf32> -> vector<16x128xf32>
    %c0_3 = arith.constant 0 : index
    %c0_4 = arith.constant 0 : index
    %3 = vector.load %arg3[%c0_3, %c0_4] : memref<1x128xf32, #tpu.memory_space<vmem>>, vector<1x128xf32>
    %4 = vector.broadcast %3 : vector<1x128xf32> to vector<16x128xf32>
    %5 = arith.addf %2, %4 : vector<16x128xf32>
    %cst_5 = arith.constant 0.000000e+00 : f32
    %6 = vector.broadcast %cst_5 : f32 to vector<16x128xf32>
    %7 = arith.maximumf %5, %6 : vector<16x128xf32>
    %c0_6 = arith.constant 0 : index
    %c0_7 = arith.constant 0 : index
    %8 = vector.load %arg4[%c0_6, %c0_7] : memref<128x128xf32, #tpu.memory_space<vmem>>, vector<128x128xf32>
    %cst_8 = arith.constant dense<0.000000e+00> : vector<16x128xf32>
    %9 = tpu.matmul %7, %8, %cst_8 {dimension_numbers = #tpu.dot_dimension_numbers<[1], [0], [0], [1], [0, 0, 1, 1], [], []>} : vector<16x128xf32>, vector<128x128xf32>, vector<16x128xf32> -> vector<16x128xf32>
    %c0_9 = arith.constant 0 : index
    %c0_10 = arith.constant 0 : index
    %10 = vector.load %arg5[%c0_9, %c0_10] : memref<1x128xf32, #tpu.memory_space<vmem>>, vector<1x128xf32>
    %11 = vector.broadcast %10 : vector<1x128xf32> to vector<16x128xf32>
    %12 = arith.addf %9, %11 : vector<16x128xf32>
    %c0_11 = arith.constant 0 : index
    %c0_12 = arith.constant 0 : index
    %13 = vector.load %arg6[%c0_11, %c0_12] : memref<16x128xf32, #tpu.memory_space<vmem>>, vector<16x128xf32>
    tpu.vector_store %arg6[%c0_11, %c0_12], %12 {strides = array<i32>} : memref<16x128xf32, #tpu.memory_space<vmem>>, vector<16x128xf32>,
    return
  }
  func.func @transform_0(%arg0: i32) -> (i32, i32) {
    %c0_i32 = arith.constant 0 : i32
    %c0_i32_0 = arith.constant 0 : i32
    return %arg0, %c0_i32 : i32, i32
  }
  func.func @transform_1(%arg0: i32) -> (i32, i32) {
    %c0_i32 = arith.constant 0 : i32
    %c0_i32_0 = arith.constant 0 : i32
    %c0_i32_1 = arith.constant 0 : i32
    return %c0_i32, %c0_i32_0 : i32, i32
  }
  func.func @transform_2(%arg0: i32) -> (i32, i32) {
    %c0_i32 = arith.constant 0 : i32
    %c0_i32_0 = arith.constant 0 : i32
    %c0_i32_1 = arith.constant 0 : i32
    return %c0_i32, %c0_i32_0 : i32, i32
  }
  func.func @transform_3(%arg0: i32) -> (i32, i32) {
    %c0_i32 = arith.constant 0 : i32
    %c0_i32_0 = arith.constant 0 : i32
    %c0_i32_1 = arith.constant 0 : i32
    return %c0_i32, %c0_i32_0 : i32, i32
  }
  func.func @transform_4(%arg0: i32) -> (i32, i32) {
    %c0_i32 = arith.constant 0 : i32
    %c0_i32_0 = arith.constant 0 : i32
    %c0_i32_1 = arith.constant 0 : i32
    return %c0_i32, %c0_i32_0 : i32, i32
  }
  func.func @transform_5(%arg0: i32) -> (i32, i32) {
    %c0_i32 = arith.constant 0 : i32
    %c0_i32_0 = arith.constant 0 : i32
    return %arg0, %c0_i32 : i32, i32
  }
}

</mosaic_0001>

<llo_original>
// kernel: tpu_custom_call.1
$region0: #{tpu_custom_call.1}
  #allocation0 [shape = 'u32[]', space=smem, size = 0x4, offset = 0x4, fixed_abs, tag = 'smem constant byte address 0x4 - core index']
  #allocation1 [shape = 'u32[72,128]{1,0:T(1,128)}', space=vmem, size = 0x9000, scoped, tag = 'internal scratch']
  %s0 = inlined_call_operand.hbm [shape: f32[16,32], index: 0, kind: input, shape index: {}]
  %s1 = inlined_call_operand.hbm [shape: f32[32,128], index: 1, kind: input, shape index: {}]
  %s2 = inlined_call_operand.vmem [shape: f32[1,128], index: 2, kind: input, shape index: {}]
  %s3 = inlined_call_operand.hbm [shape: f32[128,128], index: 3, kind: input, shape index: {}]
  %s4 = inlined_call_operand.vmem [shape: f32[1,128], index: 4, kind: input, shape index: {}]
  %s5 = inlined_call_operand.hbm [shape: f32[16,128], index: 5, kind: output, shape index: {}]
  %s6 = sld [smem:[#allocation0]]
  $region42: #{tpu_custom_call.1} parent=0
    _
  %s8 = ssub.s32 1, %s6
  %s9 = scalar_select 0, %s8, %s6
  $region1: #{tpu_custom_call.1} parent=0
    #allocation2 [shape = 'u8[8192]{0}', space=vmem, size = 0x2000, scoped, tag = 'input window, operand 0, single buffered']
    #allocation3 [shape = 's32[1]{0}', space=sflag, size = 0x4, scoped, tag = 'scoped memory for tpu_custom_call.1']
    #allocation4 [shape = 's32[1]{0}', space=sflag, size = 0x4, scoped, tag = 'scoped memory for tpu_custom_call.1']
    #allocation5 [shape = 'u8[16384]{0}', space=vmem, size = 0x4000, scoped, tag = 'input window, operand 1, single buffered']
    #allocation6 [shape = 's32[1]{0}', space=sflag, size = 0x4, scoped, tag = 'scoped memory for tpu_custom_call.1']
    #allocation7 [shape = 'u8[65536]{0}', space=vmem, size = 0x10000, scoped, tag = 'input window, operand 3, single buffered']
    #allocation8 [shape = 'u8[8192]{0}', space=vmem, size = 0x2000, scoped, tag = 'output window, operand 0, single buffered']
    %10 = vsyncpa [#allocation3], 0
    %11 = vsyncpa [#allocation6], 0
    %12 = vsyncpa [#allocation4], 0
    // Predicated region
    $region2: #{tpu_custom_call.1} parent=1 // pred_check
      _
    $region3: #{tpu_custom_call.1} parent=1 // pred_check_branch
      %14 = sbr.rel (0) target = $region5
    $region4: #{tpu_custom_call.1} parent=1 // pred_region
      %16 = vsyncadd [#allocation3], 0
      %s17 = sshll.u32 %s0, 4
      %s18 = int_to_ptr.hbm [resolvable:$true] %s17
      %s19 = sshll.u32 [#allocation2], 4
      %s20 = int_to_ptr.vmem [resolvable:$true] %s19
      %25 = dma.hbm_to_vmem [thread:$0]  %s18, 256, %s20, [#allocation3], 128, 128, 8
    $region5: #{tpu_custom_call.1} parent=1 // pred_fallthru
      _
    // Predicated region
    $region6: #{tpu_custom_call.1} parent=1 // pred_check
      _
    $region7: #{tpu_custom_call.1} parent=1 // pred_check_branch
      %27 = sbr.rel (0) target = $region9
    $region8: #{tpu_custom_call.1} parent=1 // pred_region
      %29 = vsyncadd [#allocation6], 0
      %s30 = sshll.u32 %s1, 4
      %s31 = int_to_ptr.hbm [resolvable:$true] %s30
      %s32 = sshll.u32 [#allocation5], 4
      %s33 = int_to_ptr.vmem [resolvable:$true] %s32
      %38 = dma.hbm_to_vmem [thread:$0]  %s31, 512, %s33, [#allocation6], 128, 128, 8
    $region9: #{tpu_custom_call.1} parent=1 // pred_fallthru
      _
    // Predicated region
    $region10: #{tpu_custom_call.1} parent=1 // pred_check
      _
    $region11: #{tpu_custom_call.1} parent=1 // pred_check_branch
      %40 = sbr.rel (0) target = $region13
    $region12: #{tpu_custom_call.1} parent=1 // pred_region
      _
    $region13: #{tpu_custom_call.1} parent=1 // pred_fallthru
      _
    // Predicated region
    $region14: #{tpu_custom_call.1} parent=1 // pred_check
      _
    $region15: #{tpu_custom_call.1} parent=1 // pred_check_branch
      %42 = sbr.rel (0) target = $region17
    $region16: #{tpu_custom_call.1} parent=1 // pred_region
      %44 = vsyncadd [#allocation6], 0
      %s45 = sshll.u32 %s3, 4
      %s46 = int_to_ptr.hbm [resolvable:$true] %s45
      %s47 = sshll.u32 [#allocation7], 4
      %s48 = int_to_ptr.vmem [resolvable:$true] %s47
      %53 = dma.hbm_to_vmem [thread:$0]  %s46, 2048, %s48, [#allocation6], 128, 128, 8
    $region17: #{tpu_custom_call.1} parent=1 // pred_fallthru
      _
    // Predicated region
    $region18: #{tpu_custom_call.1} parent=1 // pred_check
      _
    $region19: #{tpu_custom_call.1} parent=1 // pred_check_branch
      %55 = sbr.rel (0) target = $region21
    $region20: #{tpu_custom_call.1} parent=1 // pred_region
      _
    $region21: #{tpu_custom_call.1} parent=1 // pred_fallthru
      _
    // Predicated region
    $region22: #{tpu_custom_call.1} parent=1 // pred_check
      _
    $region23: #{tpu_custom_call.1} parent=1 // pred_check_branch
      %57 = sbr.rel (0) target = $region25
    $region24: #{tpu_custom_call.1} parent=1 // pred_region
      %59 = dma.done [#allocation3], 256
    $region25: #{tpu_custom_call.1} parent=1 // pred_fallthru
      _
    // Predicated region
    $region26: #{tpu_custom_call.1} parent=1 // pred_check
      _
    $region27: #{tpu_custom_call.1} parent=1 // pred_check_branch
      %61 = sbr.rel (0) target = $region29
    $region28: #{tpu_custom_call.1} parent=1 // pred_region
      %63 = dma.done [#allocation6], 512
    $region29: #{tpu_custom_call.1} parent=1 // pred_fallthru
      _
    // Predicated region
    $region30: #{tpu_custom_call.1} parent=1 // pred_check
      _
    $region31: #{tpu_custom_call.1} parent=1 // pred_check_branch
      %65 = sbr.rel (0) target = $region33
    $region32: #{tpu_custom_call.1} parent=1 // pred_region
      %67 = dma.done [#allocation6], 2048
    $region33: #{tpu_custom_call.1} parent=1 // pred_fallthru
      _
    %v68 = vld [vmem:[#allocation2] sm:$0xff]
    %v69 = vld [vmem:[#allocation2 + $0x8] sm:$0xff]
    %v70 = vld [vmem:[#allocation5] sm:$0xff]
    %v71 = vld [vmem:[#allocation5 + $0x8] sm:$0xff]
    %v72 = vld [vmem:[#allocation5 + $0x10] sm:$0xff]
    %v73 = vld [vmem:[#allocation5 + $0x18] sm:$0xff]
    %v74 = vld [vmem:[%s2] sm:$0x1]
    %v76 = vperm.slane %v74, 0
    %vm78 = vcmask 261120
    %v80 = vsel %vm78, %v68, 0
    %v83 = vsel %vm78, %v69, 0
    %85 = vmatpush.msra.mxu0 0.0
    %86 = vmatpush.msra.mxu0 0.0
    %87 = vmatpush.msra.mxu0 0.0
    %88 = vmatpush.msra.mxu0 0.0
    %89 = vmatpush.msra.mxu0 0.0
    %90 = vmatpush.msra.mxu0 0.0
    %91 = vmatpush.msra.mxu0 0.0
    %92 = vmatpush.msra.mxu0 0.0
    %93 = vmatpush.msra.mxu0 0.0
    %94 = vmatpush.msra.mxu0 0.0
    %95 = vmatpush.msra.mxu0 0.0
    %96 = vmatpush.msra.mxu0 0.0
    %97 = vmatpush.msra.mxu0 %v73
    %98 = vmatpush.msra.mxu0 %v72
    %99 = vmatpush.msra.mxu0 %v71
    %100 = vmatpush.msra.mxu0 %v70
    %101 = vmatmul.f32.gmra.mxu0 %v80
    %v102 = vpop.f32.mrf.mxu0
    %v103 = vadd.f32 %v76, %v102
    %104 = vmatmul.f32.gmra.mxu0 %v83
    %v105 = vpop.f32.mrf.mxu0
    %v106 = vadd.f32 %v76, %v105
    %107 = vdwg.mxu0
    %v108 = vmax.f32 %v103, 0.0
    %v109 = vmax.f32 %v106, 0.0
    %v110 = vld [vmem:[#allocation7] sm:$0xff]
    %v111 = vld [vmem:[#allocation7 + $0x8] sm:$0xff]
    %v112 = vld [vmem:[#allocation7 + $0x10] sm:$0xff]
    %v113 = vld [vmem:[#allocation7 + $0x18] sm:$0xff]
    %v114 = vld [vmem:[#allocation7 + $0x20] sm:$0xff]
    %v115 = vld [vmem:[#allocation7 + $0x28] sm:$0xff]
    %v116 = vld [vmem:[#allocation7 + $0x30] sm:$0xff]
    %v117 = vld [vmem:[#allocation7 + $0x38] sm:$0xff]
    %v118 = vld [vmem:[#allocation7 + $0x40] sm:$0xff]
    %v119 = vld [vmem:[#allocation7 + $0x48] sm:$0xff]
    %v120 = vld [vmem:[#allocation7 + $0x50] sm:$0xff]
    %v121 = vld [vmem:[#allocation7 + $0x58] sm:$0xff]
    %v122 = vld [vmem:[#allocation7 + $0x60] sm:$0xff]
    %v123 = vld [vmem:[#allocation7 + $0x68] sm:$0xff]
    %v124 = vld [vmem:[#allocation7 + $0x70] sm:$0xff]
    %v125 = vld [vmem:[#allocation7 + $0x78] sm:$0xff]
    %v126 = vld [vmem:[%s4] sm:$0x1]
    %v128 = vperm.slane %v126, 0
    %130 = vmatpush.msra.mxu0 %v125
    %131 = vmatpush.msra.mxu0 %v124
    %132 = vmatpush.msra.mxu0 %v123
    %133 = vmatpush.msra.mxu0 %v122
    %134 = vmatpush.msra.mxu0 %v121
    %135 = vmatpush.msra.mxu0 %v120
    %136 = vmatpush.msra.mxu0 %v119
    %137 = vmatpush.msra.mxu0 %v118
    %138 = vmatpush.msra.mxu0 %v117
    %139 = vmatpush.msra.mxu0 %v116
    %140 = vmatpush.msra.mxu0 %v115
    %141 = vmatpush.msra.mxu0 %v114
    %142 = vmatpush.msra.mxu0 %v113
    %143 = vmatpush.msra.mxu0 %v112
    %144 = vmatpush.msra.mxu0 %v111
    %145 = vmatpush.msra.mxu0 %v110
    %146 = vmatmul.f32.gmra.mxu0 %v108
    %v147 = vpop.f32.mrf.mxu0
    %v148 = vadd.f32 %v128, %v147
    %149 = vmatmul.f32.gmra.mxu0 %v109
    %v150 = vpop.f32.mrf.mxu0
    %v151 = vadd.f32 %v128, %v150
    %152 = vdwg.mxu0
    %153 = vst [vmem:[#allocation8] sm:$0xff] %v148
    %154 = vst [vmem:[#allocation8 + $0x8] sm:$0xff] %v151
    // Predicated region
    $region34: #{tpu_custom_call.1} parent=1 // pred_check
      _
    $region35: #{tpu_custom_call.1} parent=1 // pred_check_branch
      %156 = sbr.rel (0) target = $region37
    $region36: #{tpu_custom_call.1} parent=1 // pred_region
      %158 = vsyncadd [#allocation4], 0
      %s159 = sshll.u32 [#allocation8], 4
      %s160 = int_to_ptr.vmem [resolvable:$true] %s159
      %s161 = sshll.u32 %s5, 4
      %s162 = int_to_ptr.hbm [resolvable:$true] %s161
      %167 = dma.vmem_to_hbm [thread:$0]  %s160, 256, %s162, [#allocation4], 128, 128, 8
    $region37: #{tpu_custom_call.1} parent=1 // pred_fallthru
      _
    // Predicated region
    $region38: #{tpu_custom_call.1} parent=1 // pred_check
      _
    $region39: #{tpu_custom_call.1} parent=1 // pred_check_branch
      %169 = sbr.rel (0) target = $region41
    $region40: #{tpu_custom_call.1} parent=1 // pred_region
      %171 = dma.done [#allocation4], 256
    $region41: #{tpu_custom_call.1} parent=1 // pred_fallthru
      _
    %172 = vsyncpa [#allocation3], 1
    %173 = vsyncpa [#allocation6], 1
    %174 = vsyncpa [#allocation4], 1

</llo_original>
